<compile_context>
chip_gen: v6e
topology: v6e:2x2x1
jax: 0.10.0
libtpu: 0.0.40
codegen_flags: <defaults>
</compile_context>

<pallas_src>
import math

import jax
import jax.numpy as jnp
from jax import lax
from jax.experimental import pallas as pl
from jax.experimental.pallas import tpu as pltpu


def _rope_kernel(cos_ref, sin_ref, t_ref, o_ref):
    # cos_ref / sin_ref: (TS, KD) f32 tables (rotate_half sign folded into sin:
    # even lanes carry -sin, odd lanes +sin).  t_ref / o_ref: (TB, TS, KD).
    cos = cos_ref[...]
    sin_signed = sin_ref[...]
    kd = cos.shape[-1]
    lane = lax.broadcasted_iota(jnp.int32, (1, kd), 1)
    even = (lane % 2) == 0                       # (1, KD), broadcasts over rows

    tb = t_ref.shape[0]
    for b in range(tb):                          # static unroll (TB <= 8)
        x = t_ref[b].astype(jnp.float32)         # (TS, KD), f32 math
        # rotate_half via two XLU lane rolls (free slot) + parity select:
        #   even lane i needs x[i+1]; odd lane i needs x[i-1].
        # The only wrap-arounds (lane 0 for x_prev, lane kd-1 for x_next) land
        # on the discarded parity, so folding k positions into the lane axis
        # never mixes values across positions.
        x_next = pltpu.roll(x, shift=kd - 1, axis=1)   # y[i] = x[(i+1) % kd]
        x_prev = pltpu.roll(x, shift=1, axis=1)        # y[i] = x[(i-1) % kd]
        swapped = jnp.where(even, x_next, x_prev)
        o_ref[b] = (x * cos + swapped * sin_signed).astype(o_ref.dtype)


def _vmem_budget_bytes():
    """(block-buffer budget, physical VMEM capacity) for the current TPU gen."""
    try:
        cap = int(pltpu.get_tpu_info().vmem_capacity_bytes)
    except Exception:
        cap = 64 << 20                           # conservative (v7x-sized) fallback
    return min(cap // 3, 24 << 20), cap


def _select_tiles(B, s_new, kd, isz_in, isz_out, sub_mult, budget):
    """Choose (batch_tile, seq_tile, padded_seq_rows) under a VMEM budget."""

    def vmem(tb, ts):
        # cos + sin double-buffered (f32) + t / out double-buffered
        return 4 * ts * kd * 4 + 2 * tb * ts * kd * (isz_in + isz_out)

    # --- sequence tile -------------------------------------------------------
    if vmem(1, s_new) <= budget:
        ts, s_pad = s_new, s_new                 # single seq block (full dim)
    else:
        per_row = 4 * kd * 4 + 2 * kd * (isz_in + isz_out)
        max_rows = max(sub_mult, budget // per_row)
        ts = max(sub_mult, (max_rows // sub_mult) * sub_mult)
        d = ts
        while d >= sub_mult and s_new % d != 0:  # prefer a divisor (no padding)
            d -= sub_mult
        if d >= sub_mult and 2 * d >= ts:
            ts, s_pad = d, s_new
        else:                                    # pad the sequence instead
            s_pad = ((s_new + ts - 1) // ts) * ts

    # --- batch tile (divisor of B, capped at 8 to bound kernel unrolling) ----
    tb = 1
    for cand in range(min(B, 8), 0, -1):
        if B % cand == 0 and vmem(cand, ts) <= budget:
            tb = cand
            break

    # --- megacore (v7x): avoid a 1x1 grid when B allows >= 2 programs --------
    if (s_pad // ts) * (B // tb) < 2 and B >= 2:
        for cand in range(max(tb // 2, 1), 0, -1):
            if B % cand == 0 and B // cand >= 2:
                tb = cand
                break
    return tb, ts, s_pad


def rotary_embedding_apply(t, dim, theta=10000.0, donate_input=False):
    """Equivalent of RotaryEmbedding(dim).rotate_queries_or_keys(t, seq_dim=1)."""
    B, S, D = t.shape
    assert D == dim, "start_index=0 / rot_dim == feature dim in this kernel"
    assert D % 2 == 0, "rotate_half requires an even feature dim"
    out_dtype = t.dtype
    isz = jnp.dtype(t.dtype).itemsize

    # Lane-dense folding factor: make the lane axis a multiple of 128 when D < 128.
    k = 1
    if D < 128:
        k = 128 // math.gcd(D, 128)
    kd = k * D

    sub_mult = 16 if isz < 4 else 8
    budget, vmem_cap = _vmem_budget_bytes()

    s_new = pl.cdiv(S, k)                        # sequence rows after folding
    tb, ts, s_new_pad = _select_tiles(B, s_new, kd, isz, isz, sub_mult, budget)
    s_total = s_new_pad * k                      # padded seq length (original units)

    # --- precompute f32 cos / sign-folded sin tables once (pure JAX) ---------
    half = jnp.arange(0, D, 2, dtype=jnp.float32)[: D // 2]
    inv_freq = 1.0 / (theta ** (half / D))                             # (D//2,)
    pos = jnp.arange(s_total, dtype=jnp.float32)
    angles = jnp.repeat(pos[:, None] * inv_freq[None, :], 2, axis=-1)  # (s_total, D)
    sign = jnp.tile(jnp.array([-1.0, 1.0], jnp.float32), D // 2)       # (D,)
    cos_tab = jnp.cos(angles).reshape(s_new_pad, kd)
    sin_tab = (jnp.sin(angles) * sign[None, :]).reshape(s_new_pad, kd)

    # --- pad + fold the data to the lane-dense layout ------------------------
    x = t
    if s_total != S:
        x = jnp.pad(x, ((0, 0), (0, s_total - S), (0, 0)))
    x = x.reshape(B, s_new_pad, kd)

    n_s = s_new_pad // ts
    n_b = B // tb

    vmem_used = 4 * ts * kd * 4 + 2 * tb * ts * kd * (isz + isz)
    vmem_limit = int(min(vmem_cap, max(vmem_used + (4 << 20), 16 << 20)))

    cost = pl.CostEstimate(
        flops=6 * B * S * D,
        transcendentals=0,
        bytes_accessed=2 * B * S * D * isz + 2 * s_total * D * 4,
    )

    out = pl.pallas_call(
        _rope_kernel,
        out_shape=jax.ShapeDtypeStruct((B, s_new_pad, kd), out_dtype),
        grid_spec=pltpu.PrefetchScalarGridSpec(
            num_scalar_prefetch=0,
            # batch innermost: the cos/sin tile of an s-block stays VMEM-resident
            # across all batch steps (no table re-DMA).
            grid=(n_s, n_b),
            in_specs=[
                pl.BlockSpec((ts, kd), lambda s, b: (s, 0)),          # cos
                pl.BlockSpec((ts, kd), lambda s, b: (s, 0)),          # sin * sign
                pl.BlockSpec((tb, ts, kd), lambda s, b: (b, s, 0)),   # t (folded)
            ],
            out_specs=pl.BlockSpec((tb, ts, kd), lambda s, b: (b, s, 0)),
        ),
        compiler_params=pltpu.CompilerParams(
            dimension_semantics=("parallel", "parallel"),
            vmem_limit_bytes=vmem_limit,
        ),
        cost_estimate=cost,
        # Optional in-place rotation (caller must not reuse t afterwards).
        input_output_aliases={2: 0} if donate_input else {},
    )(cos_tab, sin_tab, x)

    out = out.reshape(B, s_total, D)
    if s_total != S:
        out = out[:, :S, :]
    return out


def _reference(t, dim, theta=10000.0):
    """Pure-JAX reference mirroring the PyTorch module."""
    B, S, D = t.shape
    half = jnp.arange(0, dim, 2, dtype=jnp.float32)[: dim // 2]
    inv_freq = 1.0 / (theta ** (half / dim))
    pos = jnp.arange(S, dtype=jnp.float32)
    freqs = jnp.repeat(pos[:, None] * inv_freq[None, :], 2, axis=-1)   # (S, D)
    x = t.astype(jnp.float32)
    xr = x.reshape(B, S, D // 2, 2)
    x1, x2 = xr[..., 0], xr[..., 1]
    rot = jnp.stack((-x2, x1), axis=-1).reshape(B, S, D)
    out = x * jnp.cos(freqs)[None] + rot * jnp.sin(freqs)[None]
    return out.astype(t.dtype)


if __name__ == "__main__":
    # Case 1: small lang-model-ish shape (module defaults), f32, lane-folded (D=32 -> 128).
    B, S, D = 2, 8, 32
    t = jax.random.normal(jax.random.PRNGKey(0), (B, S, D), dtype=jnp.float32)
    out = jax.block_until_ready(rotary_embedding_apply(t, dim=D))
    ref = _reference(t, dim=D)
    assert out.shape == t.shape and out.dtype == t.dtype
    assert jnp.allclose(out, ref, atol=1e-5, rtol=1e-5), "mismatch vs reference (case 1)"

    # Case 2: awkward sequence length — exercises the pad-then-slice path.
    B2, S2, D2 = 2, 10, 32
    t2 = jax.random.normal(jax.random.PRNGKey(1), (B2, S2, D2), dtype=jnp.float32)
    out2 = jax.block_until_ready(rotary_embedding_apply(t2, dim=D2))
    ref2 = _reference(t2, dim=D2)
    assert out2.shape == t2.shape
    assert jnp.allclose(out2, ref2, atol=1e-5, rtol=1e-5), "mismatch vs reference (case 2)"

    # Case 3: bf16 input — f32 tables/math inside the kernel, cast on store.
    B3, S3, D3 = 2, 16, 64
    t3 = jax.random.normal(jax.random.PRNGKey(2), (B3, S3, D3),
                           dtype=jnp.float32).astype(jnp.bfloat16)
    out3 = jax.block_until_ready(rotary_embedding_apply(t3, dim=D3))
    ref3 = _reference(t3, dim=D3)
    assert out3.dtype == jnp.bfloat16
    assert jnp.allclose(out3.astype(jnp.float32), ref3.astype(jnp.float32),
                        atol=2e-2, rtol=2e-2), "mismatch vs reference (case 3)"

    print("KERNEL_OK")
</pallas_src>

<mosaic_0001>
module attributes {stable_mosaic.version = 11 : i64} {
  func.func @_rope_kernel(%arg0: i32, %arg1: i32, %arg2: memref<2x128xf32, #tpu.memory_space<vmem>>, %arg3: memref<2x128xf32, #tpu.memory_space<vmem>>, %arg4: memref<1x2x128xf32, #tpu.memory_space<vmem>>, %arg5: memref<1x2x128xf32, #tpu.memory_space<vmem>>) attributes {dimension_semantics = [#tpu.dimension_semantics<parallel>, #tpu.dimension_semantics<parallel>], iteration_bounds = array<i64: 1, 2>, scalar_prefetch = 0 : i64, scratch_operands = 0 : i64, tpu.core_type = #tpu.core_type<tc>, window_params = [{transform_indices = @transform_0, window_bounds = array<i64: 2, 128>}, {transform_indices = @transform_1, window_bounds = array<i64: 2, 128>}, {transform_indices = @transform_2, window_bounds = array<i64: 1, 2, 128>}, {transform_indices = @transform_3, window_bounds = array<i64: 1, 2, 128>}]} {
    %c0 = arith.constant 0 : index
    %c0_0 = arith.constant 0 : index
    %0 = vector.load %arg2[%c0, %c0_0] : memref<2x128xf32, #tpu.memory_space<vmem>>, vector<2x128xf32>
    %c0_1 = arith.constant 0 : index
    %c0_2 = arith.constant 0 : index
    %1 = vector.load %arg3[%c0_1, %c0_2] : memref<2x128xf32, #tpu.memory_space<vmem>>, vector<2x128xf32>
    %2 = tpu.iota {dimensions = array<i32: 1>} : vector<1x128xi32>
    %c2_i32 = arith.constant 2 : i32
    %c0_i32 = arith.constant 0 : i32
    %3 = arith.cmpi eq, %c2_i32, %c0_i32 : i32
    %c1_i32 = arith.constant 1 : i32
    %4 = arith.select %3, %c1_i32, %c2_i32 : i32
    %5 = vector.broadcast %4 : i32 to vector<1x128xi32>
    %6 = arith.remsi %2, %5 : vector<1x128xi32>
    %c0_i32_3 = arith.constant 0 : i32
    %7 = vector.broadcast %c0_i32_3 : i32 to vector<1x128xi32>
    %8 = arith.cmpi ne, %6, %7 : vector<1x128xi32>
    %c0_i32_4 = arith.constant 0 : i32
    %9 = vector.broadcast %c0_i32_4 : i32 to vector<1x128xi32>
    %10 = arith.cmpi slt, %6, %9 : vector<1x128xi32>
    %c0_i32_5 = arith.constant 0 : i32
    %11 = arith.cmpi slt, %4, %c0_i32_5 : i32
    %12 = vector.broadcast %11 : i1 to vector<1x128xi1>
    %13 = vector.broadcast %12 : vector<1x128xi1> to vector<1x128xi1>
    %14 = arith.xori %10, %13 : vector<1x128xi1>
    %15 = arith.andi %14, %8 : vector<1x128xi1>
    %16 = vector.broadcast %4 : i32 to vector<1x128xi32>
    %17 = arith.addi %6, %16 : vector<1x128xi32>
    %18 = arith.select %15, %17, %6 : vector<1x128xi1>, vector<1x128xi32>
    %c0_i32_6 = arith.constant 0 : i32
    %19 = vector.broadcast %c0_i32_6 : i32 to vector<1x128xi32>
    %20 = arith.cmpi eq, %18, %19 : vector<1x128xi32>
    %c0_7 = arith.constant 0 : index
    %c0_8 = arith.constant 0 : index
    %c0_9 = arith.constant 0 : index
    %21 = vector.load %arg4[%c0_7, %c0_8, %c0_9] : memref<1x2x128xf32, #tpu.memory_space<vmem>>, vector<1x2x128xf32>
    %22 = vector.shape_cast %21 : vector<1x2x128xf32> to vector<2x128xf32>
    %c127_i32 = arith.constant 127 : i32
    %23 = tpu.dynamic_rotate %22 by %c127_i32 dim 1 : vector<2x128xf32>, i32 -> vector<2x128xf32>
    %c1_i32_10 = arith.constant 1 : i32
    %24 = tpu.dynamic_rotate %22 by %c1_i32_10 dim 1 : vector<2x128xf32>, i32 -> vector<2x128xf32>
    %25 = vector.shape_cast %20 : vector<1x128xi1> to vector<1x128xi1>
    %26 = vector.broadcast %25 : vector<1x128xi1> to vector<2x128xi1>
    %27 = arith.select %26, %23, %24 : vector<2x128xi1>, vector<2x128xf32>
    %28 = arith.mulf %22, %0 : vector<2x128xf32>
    %29 = arith.mulf %27, %1 : vector<2x128xf32>
    %30 = arith.addf %28, %29 : vector<2x128xf32>
    %c0_11 = arith.constant 0 : index
    %c0_12 = arith.constant 0 : index
    %c0_13 = arith.constant 0 : index
    %31 = vector.load %arg5[%c0_11, %c0_12, %c0_13] : memref<1x2x128xf32, #tpu.memory_space<vmem>>, vector<1x2x128xf32>
    %32 = vector.shape_cast %31 : vector<1x2x128xf32> to vector<2x128xf32>
    %33 = vector.shape_cast %30 : vector<2x128xf32> to vector<1x2x128xf32>
    tpu.vector_store %arg5[%c0_11, %c0_12, %c0_13], %33 {strides = array<i32>} : memref<1x2x128xf32, #tpu.memory_space<vmem>>, vector<1x2x128xf32>,
    return
  }
  func.func @transform_0(%arg0: i32, %arg1: i32) -> (i32, i32) {
    %c0_i32 = arith.constant 0 : i32
    %c0_i32_0 = arith.constant 0 : i32
    return %arg0, %c0_i32 : i32, i32
  }
  func.func @transform_1(%arg0: i32, %arg1: i32) -> (i32, i32) {
    %c0_i32 = arith.constant 0 : i32
    %c0_i32_0 = arith.constant 0 : i32
    return %arg0, %c0_i32 : i32, i32
  }
  func.func @transform_2(%arg0: i32, %arg1: i32) -> (i32, i32, i32) {
    %c0_i32 = arith.constant 0 : i32
    %c0_i32_0 = arith.constant 0 : i32
    return %arg1, %arg0, %c0_i32 : i32, i32, i32
  }
  func.func @transform_3(%arg0: i32, %arg1: i32) -> (i32, i32, i32) {
    %c0_i32 = arith.constant 0 : i32
    %c0_i32_0 = arith.constant 0 : i32
    return %arg1, %arg0, %c0_i32 : i32, i32, i32
  }
}

</mosaic_0001>

<llo_original>
// kernel: tpu_custom_call.1
$region0: #{tpu_custom_call.1}
  #allocation0 [shape = 'u32[]', space=smem, size = 0x4, offset = 0x4, fixed_abs, tag = 'smem constant byte address 0x4 - core index']
  #allocation1 [shape = 'u32[144,128]{1,0:T(1,128)}', space=vmem, size = 0x12000, scoped, tag = 'internal scratch']
  %s0 = inlined_call_operand.hbm [shape: f32[2,128], index: 0, kind: input, shape index: {}]
  %s1 = inlined_call_operand.hbm [shape: f32[2,128], index: 1, kind: input, shape index: {}]
  %s2 = inlined_call_operand.hbm [shape: f32[2,2,128], index: 2, kind: input, shape index: {}]
  %s3 = inlined_call_operand.hbm [shape: f32[2,2,128], index: 3, kind: output, shape index: {}]
  %s4 = sld [smem:[#allocation0]]
  $region57: #{tpu_custom_call.1} parent=0
    _
  %s6 = ssub.s32 1, %s4
  %s7 = scalar_select 0, %s6, %s4
  $region1: #{tpu_custom_call.1} parent=0
    #allocation2 [shape = 'u8[1024]{0}', space=vmem, size = 0x400, scoped, tag = 'input window, operand 0, single buffered']
    #allocation3 [shape = 's32[2]{0}', space=sflag, size = 0x8, scoped, tag = 'scoped memory for tpu_custom_call.1']
    #allocation4 [shape = 's32[2]{0}', space=sflag, size = 0x8, scoped, tag = 'scoped memory for tpu_custom_call.1']
    #allocation5 [shape = 'u8[1024]{0}', space=vmem, size = 0x400, scoped, tag = 'input window, operand 1, single buffered']
    #allocation6 [shape = 's32[1]{0}', space=sflag, size = 0x4, scoped, tag = 'scoped memory for tpu_custom_call.1']
    #allocation7 [shape = 'u8[2048]{0}', space=vmem, size = 0x800, scoped, tag = 'input window, operand 2']
    #allocation8 [shape = 'u8[2048]{0}', space=vmem, size = 0x800, scoped, tag = 'output window, operand 0']
    %8 = vsyncpa [#allocation3], 0
    %9 = vsyncpa [#allocation6], 0
    %10 = vsyncpa [#allocation4], 0
    %s11 = scalar_lea.sflag [#allocation4], 1
    %12 = vsyncpa %s11, 0
    loop: start=0, step=1, limit=4
    $region2: #{tpu_custom_call.1} parent=1 // loop_pre_header
      _
    $region3: #{tpu_custom_call.1} parent=1 // loop_header
      %s14 = sphi 0, %s18
      %p15 = scmp.ge.s32.totalorder %s14, 4
      %s21 = sphi 0, %s33
      %s22 = sphi 0, %s29
      %s23 = sphi 0, %s21
      %s24 = sphi 0, %s22
      %s25 = sphi 0, %s23
      %s26 = sphi 0, %s24
      %s36 = sphi 0, %s38
      %s39 = sphi 0, %s36
      %s40 = sphi 0, %s39
      %s56 = sphi 0, %s40
      %s62 = sphi 0, %s64
      %s65 = sphi 0, %s62
      %s66 = sphi 0, %s65
      %s82 = sphi 0, %s66
      %s90 = sphi 0, %s92
      %s93 = sphi 0, %s90
      %s94 = sphi 0, %s93
      %s110 = sphi 0, %s94
      %s118 = sphi 0, %s120
      %s121 = sphi 0, %s118
      %s122 = sphi 0, %s121
      %s138 = sphi 0, %s122
    $region4: #{tpu_custom_call.1} parent=1 // loop_header_branch
      %17 = sbr.rel (%p15) target = $region8
    $region5: #{tpu_custom_call.1} parent=1 // loop_body
      %s19 = ssub.s32 %s14, 1
      %s20 = ssub.s32 %s14, 2
      %s27 = sadd.s32 1, %s22
      %p28 = scmp.ge.s32.totalorder %s27, 2
      %s29 = scalar_select %p28, 0, %s27
      %s30 = sadd.s32 1, %s21
      %s31 = scalar_select %p28, %s30, %s21
      %p32 = scmp.ge.s32.totalorder %s31, 1
      %s33 = scalar_select %p32, 0, %s31
      %s34 = ssub.s32 %s21, %s33
      %p35 = scmp.eq.s32.totalorder %s34, 0
      %s37 = sadd.s32 %s36, 1
      %s38 = scalar_select %p35, %s36, %s37
      %p41 = pneg %p35
      %p42 = scmp.eq.s32.totalorder %s14, 1
      %p43 = por %p41, %p42
      %p44 = scmp.ne.s32.totalorder %s36, %s39
      %p45 = scmp.eq.s32.totalorder %s14, 0
      %p46 = por %p44, %p45
      %p47 = scmp.ne.s32.totalorder %s36, %s39
      %p48 = scmp.eq.s32.totalorder %s19, 1
      %p49 = por %p47, %p48
      %p50 = scmp.ne.s32.totalorder %s39, %s40
      %p51 = scmp.eq.s32.totalorder %s19, 0
      %p52 = por %p50, %p51
      %p53 = scmp.ne.s32.totalorder %s39, %s40
      %p54 = scmp.eq.s32.totalorder %s20, 1
      %p55 = por %p53, %p54
      %p57 = scmp.ne.s32.totalorder %s40, %s56
      %p58 = scmp.eq.s32.totalorder %s20, 0
      %p59 = por %p57, %p58
      %s60 = ssub.s32 %s21, %s33
      %p61 = scmp.eq.s32.totalorder %s60, 0
      %s63 = sadd.s32 %s62, 1
      %s64 = scalar_select %p61, %s62, %s63
      %p67 = pneg %p61
      %p68 = scmp.eq.s32.totalorder %s14, 1
      %p69 = por %p67, %p68
      %p70 = scmp.ne.s32.totalorder %s62, %s65
      %p71 = scmp.eq.s32.totalorder %s14, 0
      %p72 = por %p70, %p71
      %p73 = scmp.ne.s32.totalorder %s62, %s65
      %p74 = scmp.eq.s32.totalorder %s19, 1
      %p75 = por %p73, %p74
      %p76 = scmp.ne.s32.totalorder %s65, %s66
      %p77 = scmp.eq.s32.totalorder %s19, 0
      %p78 = por %p76, %p77
      %p79 = scmp.ne.s32.totalorder %s65, %s66
      %p80 = scmp.eq.s32.totalorder %s20, 1
      %p81 = por %p79, %p80
      %p83 = scmp.ne.s32.totalorder %s66, %s82
      %p84 = scmp.eq.s32.totalorder %s20, 0
      %p85 = por %p83, %p84
      %s86 = ssub.s32 %s22, %s29
      %s87 = ssub.s32 %s21, %s33
      %s88 = sor.u32 %s86, %s87
      %p89 = scmp.eq.s32.totalorder %s88, 0
      %s91 = sadd.s32 %s90, 1
      %s92 = scalar_select %p89, %s90, %s91
      %p95 = pneg %p89
      %p96 = scmp.eq.s32.totalorder %s14, 1
      %p97 = por %p95, %p96
      %p98 = scmp.ne.s32.totalorder %s90, %s93
      %p99 = scmp.eq.s32.totalorder %s14, 0
      %p100 = por %p98, %p99
      %p101 = scmp.ne.s32.totalorder %s90, %s93
      %p102 = scmp.eq.s32.totalorder %s19, 1
      %p103 = por %p101, %p102
      %p104 = scmp.ne.s32.totalorder %s93, %s94
      %p105 = scmp.eq.s32.totalorder %s19, 0
      %p106 = por %p104, %p105
      %p107 = scmp.ne.s32.totalorder %s93, %s94
      %p108 = scmp.eq.s32.totalorder %s20, 1
      %p109 = por %p107, %p108
      %p111 = scmp.ne.s32.totalorder %s94, %s110
      %p112 = scmp.eq.s32.totalorder %s20, 0
      %p113 = por %p111, %p112
      %s114 = ssub.s32 %s22, %s29
      %s115 = ssub.s32 %s21, %s33
      %s116 = sor.u32 %s114, %s115
      %p117 = scmp.eq.s32.totalorder %s116, 0
      %s119 = sadd.s32 %s118, 1
      %s120 = scalar_select %p117, %s118, %s119
      %p123 = pneg %p117
      %p124 = scmp.eq.s32.totalorder %s14, 1
      %p125 = por %p123, %p124
      %p126 = scmp.ne.s32.totalorder %s118, %s121
      %p127 = scmp.eq.s32.totalorder %s14, 0
      %p128 = por %p126, %p127
      %p129 = scmp.ne.s32.totalorder %s118, %s121
      %p130 = scmp.eq.s32.totalorder %s19, 1
      %p131 = por %p129, %p130
      %p132 = scmp.ne.s32.totalorder %s121, %s122
      %p133 = scmp.eq.s32.totalorder %s19, 0
      %p134 = por %p132, %p133
      %p135 = scmp.ne.s32.totalorder %s121, %s122
      %p136 = scmp.eq.s32.totalorder %s20, 1
      %p137 = por %p135, %p136
      %p139 = scmp.ne.s32.totalorder %s122, %s138
      %p140 = scmp.eq.s32.totalorder %s20, 0
      %p141 = por %p139, %p140
      %p142 = scmp.le.s32.totalorder 1, %s14
      %p143 = scmp.lt.s32.totalorder %s14, 3
      %p144 = pnand %p142, %p143
      %p145 = pneg %p144
      // Predicated region
      $region9: #{tpu_custom_call.1} parent=5 // pred_check
        _
      $region10: #{tpu_custom_call.1} parent=5 // pred_check_branch
        %147 = sbr.rel (%p144) target = $region12
      $region11: #{tpu_custom_call.1} parent=5 // pred_region
        %s148 = ssub.s32 %s14, 1
        // Predicated region
        $region13: #{tpu_custom_call.1} parent=11 // pred_check
          %p149 = pneg %p52
        $region14: #{tpu_custom_call.1} parent=11 // pred_check_branch
          %151 = sbr.rel (%p149) target = $region16
        $region15: #{tpu_custom_call.1} parent=11 // pred_region
          %s153 = ssub.s32 32, 32
          %154 = vsyncadd [#allocation3], %s153
          %s155 = smul.addr %s23, 32
          %s156 = scalar_lea.hbm %s0, %s155
          %s158 = sshll.u32 [#allocation2], 4
          %s159 = int_to_ptr.vmem [resolvable:$true] %s158
          %161 = dma.hbm_to_vmem [thread:$0]  %s156, 32, %s159, [#allocation3]
        $region16: #{tpu_custom_call.1} parent=11 // pred_fallthru
          _
        // Predicated region
        $region17: #{tpu_custom_call.1} parent=11 // pred_check
          %p162 = pneg %p78
        $region18: #{tpu_custom_call.1} parent=11 // pred_check_branch
          %164 = sbr.rel (%p162) target = $region20
        $region19: #{tpu_custom_call.1} parent=11 // pred_region
          %s166 = ssub.s32 32, 32
          %167 = vsyncadd [#allocation6], %s166
          %s168 = smul.addr %s23, 32
          %s169 = scalar_lea.hbm %s1, %s168
          %s171 = sshll.u32 [#allocation5], 4
          %s172 = int_to_ptr.vmem [resolvable:$true] %s171
          %174 = dma.hbm_to_vmem [thread:$0]  %s169, 32, %s172, [#allocation6]
        $region20: #{tpu_custom_call.1} parent=11 // pred_fallthru
          _
      $region12: #{tpu_custom_call.1} parent=5 // pred_fallthru
        _
      %p175 = scmp.lt.s32.totalorder %s14, 2
      // Predicated region
      $region21: #{tpu_custom_call.1} parent=5 // pred_check
        %p176 = pneg %p175
      $region22: #{tpu_custom_call.1} parent=5 // pred_check_branch
        %178 = sbr.rel (%p176) target = $region24
      $region23: #{tpu_custom_call.1} parent=5 // pred_region
        // Predicated region
        $region25: #{tpu_custom_call.1} parent=23 // pred_check
          %p179 = pneg %p100
        $region26: #{tpu_custom_call.1} parent=23 // pred_check_branch
          %181 = sbr.rel (%p179) target = $region28
        $region27: #{tpu_custom_call.1} parent=23 // pred_region
          %s182 = sand.u32 %s14, 1
          %s183 = scalar_lea.sflag [#allocation3], %s182
          %s184 = sand.u32 %s90, 1
          %s185 = smul.addr %s184, 2
          %s186 = scalar_lea.vmem [#allocation7], %s185
          %s188 = ssub.s32 32, 32
          %189 = vsyncadd %s183, %s188
          %s190 = sadd.s32 %s21, %s22
          %s191 = smul.addr %s190, 32
          %s192 = scalar_lea.hbm %s2, %s191
          %s194 = sshll.u32 %s186, 4
          %s195 = int_to_ptr.vmem [resolvable:$true] %s194
          %197 = dma.hbm_to_vmem [thread:$0]  %s192, 32, %s195, %s183
        $region28: #{tpu_custom_call.1} parent=23 // pred_fallthru
          _
      $region24: #{tpu_custom_call.1} parent=5 // pred_fallthru
        _
      %p198 = scmp.le.s32.totalorder 1, %s14
      %p199 = scmp.lt.s32.totalorder %s14, 3
      %p200 = pnand %p198, %p199
      %p201 = pneg %p200
      // Predicated region
      $region29: #{tpu_custom_call.1} parent=5 // pred_check
        _
      $region30: #{tpu_custom_call.1} parent=5 // pred_check_branch
        %203 = sbr.rel (%p200) target = $region32
      $region31: #{tpu_custom_call.1} parent=5 // pred_region
        %s204 = ssub.s32 %s14, 1
        // Predicated region
        $region33: #{tpu_custom_call.1} parent=31 // pred_check
          %p205 = pneg %p52
        $region34: #{tpu_custom_call.1} parent=31 // pred_check_branch
          %207 = sbr.rel (%p205) target = $region36
        $region35: #{tpu_custom_call.1} parent=31 // pred_region
          %208 = dma.done [#allocation3], 32
        $region36: #{tpu_custom_call.1} parent=31 // pred_fallthru
          _
        // Predicated region
        $region37: #{tpu_custom_call.1} parent=31 // pred_check
          %p209 = pneg %p78
        $region38: #{tpu_custom_call.1} parent=31 // pred_check_branch
          %211 = sbr.rel (%p209) target = $region40
        $region39: #{tpu_custom_call.1} parent=31 // pred_region
          %212 = dma.done [#allocation6], 32
        $region40: #{tpu_custom_call.1} parent=31 // pred_fallthru
          _
        %s213 = sand.u32 %s19, 1
        %s214 = scalar_lea.sflag [#allocation3], %s213
        %s215 = sand.u32 %s93, 1
        %s216 = smul.addr %s215, 2
        %s217 = scalar_lea.vmem [#allocation7], %s216
        // Predicated region
        $region41: #{tpu_custom_call.1} parent=31 // pred_check
          %p218 = pneg %p106
        $region42: #{tpu_custom_call.1} parent=31 // pred_check_branch
          %220 = sbr.rel (%p218) target = $region44
        $region43: #{tpu_custom_call.1} parent=31 // pred_region
          %221 = dma.done %s214, 32
        $region44: #{tpu_custom_call.1} parent=31 // pred_fallthru
          _
        %p222 = pneg %p52
        %p223 = pneg %p49
        %p224 = pneg %p78
        %p225 = pneg %p75
        %s226 = sand.u32 %s19, 1
        %s227 = scalar_lea.sflag [#allocation3], %s226
        %s228 = sand.u32 %s93, 1
        %s229 = smul.addr %s228, 2
        %s230 = scalar_lea.vmem [#allocation7], %s229
        %p231 = pneg %p106
        %p232 = pneg %p103
        %p233 = pneg %p134
        %p234 = pneg %p131
        %s235 = sand.u32 %s121, 1
        %s236 = scalar_lea.sflag [#allocation4], %s235
        %s237 = sand.u32 %s121, 1
        %s238 = smul.addr %s237, 2
        %s239 = scalar_lea.vmem [#allocation8], %s238
        %v240 = vld [vmem:[#allocation2] sm:$0x3]
        %v241 = vld [vmem:[#allocation5] sm:$0x3]
        %v242 = vlaneseq
        %v243 = vand.u32 %v242, 127
        %vm244 = vcmp.lt.s32.totalorder %v243, 0
        %v245 = vsub.s32 0, %v243
        %v246 = vsel %vm244, %v245, %v243
        %v247 = vshrl.u32 %v246, 1
        %v248 = vand.u32 %v246, 1
        %v249 = vsub.s32 0, %v248
        %v250 = vsel %vm244, %v249, %v248
        %vm251 = vcmp.ne.s32.totalorder %v250, 0
        %vm252 = vcmp.lt.s32.totalorder %v250, 0
        %vm253 = vmand %vm252, %vm251
        %v254 = vadd.s32 %v250, 2
        %v255 = vsel %vm253, %v254, %v250
        %vm256 = vcmp.eq.s32.totalorder %v255, 0
        %v257 = vld [vmem:[%s217] sm:$0x3]
        %258 = vrot.lane.b32.xlu0 %v257, 127
        %v259 = vpop.permute.xlu0 %258
        %260 = vrot.lane.b32.xlu0 %v257, 1
        %v261 = vpop.permute.xlu0 %260
        %v262 = vsel %vm256, 1, 0
        %vm263 = vcmp.eq.s32.totalorder %v262, 1
        %v264 = vsel %vm263, %v259, %v261
        %v265 = vmul.f32 %v257, %v240
        %v266 = vmul.f32 %v264, %v241
        %v267 = vadd.f32 %v265, %v266
        %268 = vst [vmem:[%s239] sm:$0x3] %v267
        %s269 = sand.u32 %s121, 1
        %s270 = scalar_lea.sflag [#allocation4], %s269
        %s271 = sand.u32 %s121, 1
        %s272 = smul.addr %s271, 2
        %s273 = scalar_lea.vmem [#allocation8], %s272
        // Predicated region
        $region45: #{tpu_custom_call.1} parent=31 // pred_check
          %p274 = pneg %p131
        $region46: #{tpu_custom_call.1} parent=31 // pred_check_branch
          %276 = sbr.rel (%p274) target = $region48
        $region47: #{tpu_custom_call.1} parent=31 // pred_region
          %s278 = ssub.s32 32, 32
          %279 = vsyncadd %s270, %s278
          %s280 = sadd.s32 %s23, %s24
          %s281 = smul.addr %s280, 32
          %s282 = scalar_lea.hbm %s3, %s281
          %s284 = sshll.u32 %s273, 4
          %s285 = int_to_ptr.vmem [resolvable:$true] %s284
          %287 = dma.vmem_to_hbm [thread:$0]  %s285, 32, %s282, %s270
        $region48: #{tpu_custom_call.1} parent=31 // pred_fallthru
          _
      $region32: #{tpu_custom_call.1} parent=5 // pred_fallthru
        _
      %p288 = scmp.le.s32.totalorder 2, %s14
      // Predicated region
      $region49: #{tpu_custom_call.1} parent=5 // pred_check
        %p289 = pneg %p288
      $region50: #{tpu_custom_call.1} parent=5 // pred_check_branch
        %291 = sbr.rel (%p289) target = $region52
      $region51: #{tpu_custom_call.1} parent=5 // pred_region
        %s292 = ssub.s32 %s14, 2
        // Predicated region
        $region53: #{tpu_custom_call.1} parent=51 // pred_check
          %p293 = pneg %p137
        $region54: #{tpu_custom_call.1} parent=51 // pred_check_branch
          %295 = sbr.rel (%p293) target = $region56
        $region55: #{tpu_custom_call.1} parent=51 // pred_region
          %s296 = sand.u32 %s122, 1
          %s297 = scalar_lea.sflag [#allocation4], %s296
          %s298 = sand.u32 %s122, 1
          %s299 = smul.addr %s298, 2
          %s300 = scalar_lea.vmem [#allocation8], %s299
          %301 = dma.done %s297, 32
        $region56: #{tpu_custom_call.1} parent=51 // pred_fallthru
          _
      $region52: #{tpu_custom_call.1} parent=5 // pred_fallthru
        _
    $region6: #{tpu_custom_call.1} parent=1 // loop_footer
      %s18 = sadd.s32 1, %s14
    $region7: #{tpu_custom_call.1} parent=1 // loop_footer_branch
      %13 = sbr.rel target = $region3
    $region8: #{tpu_custom_call.1} parent=1 // loop_exit
      _
    %302 = vsyncpa [#allocation3], 1
    %s303 = scalar_lea.sflag [#allocation3], 1
    %304 = vsyncpa %s303, 1
    %305 = vsyncpa [#allocation6], 1
    %306 = vsyncpa [#allocation4], 1
    %s307 = scalar_lea.sflag [#allocation4], 1
    %308 = vsyncpa %s307, 1

</llo_original>
